<compile_context>
chip_gen: v5e
topology: v5e:2x2
jax: 0.10.0
libtpu: 0.0.40
codegen_flags: <defaults>
</compile_context>

<pallas_src>
import functools
import math

import numpy as np
import jax
import jax.numpy as jnp
from jax import lax
from jax.experimental import pallas as pl
from jax.experimental.pallas import tpu as pltpu

LANE = 128

try:
    _VMEM_LIMIT = int(min(pltpu.get_tpu_info().vmem_capacity_bytes * 3 // 4,
                          96 * 1024 * 1024))
except Exception:  # pragma: no cover - conservative fallback
    _VMEM_LIMIT = 32 * 1024 * 1024


def _cparams(*sems):
    return pltpu.CompilerParams(dimension_semantics=tuple(sems),
                                vmem_limit_bytes=_VMEM_LIMIT)


def _round_up(v, m):
    return ((v + m - 1) // m) * m


def _pad_time(x, t_pad):
    t = x.shape[-1]
    if t == t_pad:
        return x
    pads = [(0, 0)] * (x.ndim - 1) + [(0, t_pad - t)]
    return jnp.pad(x, pads)


def _leaky(x, slope):
    return jnp.where(x >= 0, x, slope * x)


# ----------------------------------------------------------------------------
# Pallas kernels
# ----------------------------------------------------------------------------

@functools.partial(jax.jit, static_argnames=("scale", "lrelu_slope"))
def pallas_linear(x2d, w, b, *, scale=None, lrelu_slope=None):
    """o = x2d @ w + b with optional fused scale / LeakyReLU (w is bf16)."""
    M, K = x2d.shape
    N = w.shape[1]

    def kernel(x_ref, w_ref, b_ref, o_ref):
        o = jnp.dot(x_ref[...].astype(jnp.bfloat16), w_ref[...],
                    preferred_element_type=jnp.float32) + b_ref[...]
        if scale is not None:
            o = o * scale
        if lrelu_slope is not None:
            o = _leaky(o, lrelu_slope)
        o_ref[...] = o.astype(o_ref.dtype)

    return pl.pallas_call(
        kernel,
        out_shape=jax.ShapeDtypeStruct((M, N), x2d.dtype),
        grid=(1,),
        in_specs=[pl.BlockSpec((M, K), lambda i: (0, 0)),
                  pl.BlockSpec((K, N), lambda i: (0, 0)),
                  pl.BlockSpec((1, N), lambda i: (0, 0))],
        out_specs=pl.BlockSpec((M, N), lambda i: (0, 0)),
        compiler_params=_cparams("arbitrary"),
    )(x2d, w, b.reshape(1, N))


@functools.partial(
    jax.jit,
    static_argnames=("dilation", "pad_left", "pad_right", "pre_slope",
                     "post_act", "out_scale", "phase_groups"))
def fused_conv1d(x, w2, b2, *, dilation=1, pad_left=0, pad_right=0,
                 in_mask=None, pre_slope=None, add_bcast=None, residual=None,
                 post_act=None, out_scale=None, out_mask=None, phase_groups=1):
    """Fused torch-style Conv1d (cross-correlation), one MXU matmul per batch.

    x: [B, C_in, T] f32, w2: [C_rows, K*C_in] bf16 (tap-major, pre-laid-out at
    init), b2: [C_rows, 1] f32.  Input mask, pre-LeakyReLU, bias, broadcast
    conditioning add, post activation, residual add, output scale and output
    mask are all fused epilogues.  When phase_groups > 1 (fused polyphase
    ConvTranspose1d) the output is [B, groups, C_rows//groups, T_out].
    """
    B, C_in, T = x.shape
    C_rows = w2.shape[0]
    K = w2.shape[1] // C_in
    T_out = T + pad_left + pad_right - dilation * (K - 1)
    use_col = not (K == 1 and pad_left == 0 and pad_right == 0)

    has_in_mask = in_mask is not None
    has_add = add_bcast is not None
    has_res = residual is not None
    has_out_mask = out_mask is not None

    opt_arrays, opt_specs = [], []
    if has_in_mask:
        opt_arrays.append(in_mask)
        opt_specs.append(pl.BlockSpec((1, 1, T), lambda i: (i, 0, 0)))
    if has_add:
        opt_arrays.append(add_bcast)
        opt_specs.append(pl.BlockSpec((1, C_rows, 1), lambda i: (i, 0, 0)))
    if has_res:
        opt_arrays.append(residual)
        opt_specs.append(pl.BlockSpec((1, C_rows, T_out), lambda i: (i, 0, 0)))
    if has_out_mask:
        opt_arrays.append(out_mask)
        opt_specs.append(pl.BlockSpec((1, 1, T_out), lambda i: (i, 0, 0)))

    def kernel(*refs):
        x_ref, w_ref, b_ref = refs[0], refs[1], refs[2]
        idx = 3
        m_in_ref = ab_ref = r_ref = mo_ref = None
        if has_in_mask:
            m_in_ref = refs[idx]; idx += 1
        if has_add:
            ab_ref = refs[idx]; idx += 1
        if has_res:
            r_ref = refs[idx]; idx += 1
        if has_out_mask:
            mo_ref = refs[idx]; idx += 1
        o_ref = refs[idx]; idx += 1
        col_ref = refs[idx] if use_col else None

        xb = x_ref[0]                                   # [C_in, T] f32
        if m_in_ref is not None:
            xb = xb * m_in_ref[0]
        if pre_slope is not None:
            xb = _leaky(xb, pre_slope)
        xb = xb.astype(jnp.bfloat16)                    # MXU operand

        if use_col:
            # im2col slab in VMEM; only halo columns a tap cannot cover get
            # zeroed (no full-slab zero-init pass).
            # TODO(synk): for C_in >= 128 replace with K shifted matmuls.
            for k in range(K):
                off = k * dilation - pad_left
                dst_lo = max(0, -off)
                dst_hi = min(T_out, T - off)
                rows = slice(k * C_in, (k + 1) * C_in)
                if dst_hi <= dst_lo:
                    col_ref[rows, :] = jnp.zeros((C_in, T_out), jnp.bfloat16)
                    continue
                if dst_lo > 0:
                    col_ref[rows, :dst_lo] = jnp.zeros((C_in, dst_lo), jnp.bfloat16)
                col_ref[rows, dst_lo:dst_hi] = xb[:, dst_lo + off:dst_hi + off]
                if dst_hi < T_out:
                    col_ref[rows, dst_hi:] = jnp.zeros((C_in, T_out - dst_hi),
                                                       jnp.bfloat16)
            rhs = col_ref[...]
        else:
            rhs = xb

        h = jnp.dot(w_ref[...], rhs, preferred_element_type=jnp.float32) + b_ref[...]
        if ab_ref is not None:
            h = h + ab_ref[0]                           # [C_rows,1] broadcast
        if post_act == "relu":
            h = jnp.maximum(h, 0.0)
        elif post_act == "tanh":
            h = jnp.tanh(h)
        if r_ref is not None:
            h = h + r_ref[0]
        if out_scale is not None:
            h = h * out_scale
        if mo_ref is not None:
            h = h * mo_ref[0]
        if phase_groups > 1:
            cg = C_rows // phase_groups
            for r in range(phase_groups):
                o_ref[0, r] = h[r * cg:(r + 1) * cg].astype(o_ref.dtype)
        else:
            o_ref[0] = h.astype(o_ref.dtype)

    if phase_groups > 1:
        cg = C_rows // phase_groups
        out_shape = jax.ShapeDtypeStruct((B, phase_groups, cg, T_out), x.dtype)
        out_spec = pl.BlockSpec((1, phase_groups, cg, T_out), lambda i: (i, 0, 0, 0))
    else:
        out_shape = jax.ShapeDtypeStruct((B, C_rows, T_out), x.dtype)
        out_spec = pl.BlockSpec((1, C_rows, T_out), lambda i: (i, 0, 0))

    in_specs = [pl.BlockSpec((1, C_in, T), lambda i: (i, 0, 0)),
                pl.BlockSpec((C_rows, K * C_in), lambda i: (0, 0)),
                pl.BlockSpec((C_rows, 1), lambda i: (0, 0))] + opt_specs
    scratch = [pltpu.VMEM((K * C_in, T_out), jnp.bfloat16)] if use_col else []

    # TODO(synk): real-length decode needs time-tiling with halo sized from the
    # VMEM budget; at these shapes a per-batch full-T block fits easily.
    return pl.pallas_call(
        kernel,
        out_shape=out_shape,
        grid=(B,),
        in_specs=in_specs,
        out_specs=out_spec,
        scratch_shapes=scratch,
        compiler_params=_cparams("parallel"),
    )(x, w2, b2, *opt_arrays)


@jax.jit
def pallas_add_layernorm(x, y, gamma, beta):
    """VITS LayerNorm over the channel dim of (x + y); x, y: [B, C, T]."""
    B, C, T = x.shape
    eps = 1e-5

    def kernel(x_ref, y_ref, g_ref, b_ref, o_ref):
        xb = x_ref[0] + y_ref[0]
        mean = jnp.mean(xb, axis=0, keepdims=True)
        var = jnp.mean(jnp.square(xb - mean), axis=0, keepdims=True)
        xn = (xb - mean) * jax.lax.rsqrt(var + eps)
        o_ref[0] = (xn * g_ref[...] + b_ref[...]).astype(o_ref.dtype)

    return pl.pallas_call(
        kernel,
        out_shape=jax.ShapeDtypeStruct((B, C, T), x.dtype),
        grid=(B,),
        in_specs=[pl.BlockSpec((1, C, T), lambda i: (i, 0, 0)),
                  pl.BlockSpec((1, C, T), lambda i: (i, 0, 0)),
                  pl.BlockSpec((C, 1), lambda i: (0, 0)),
                  pl.BlockSpec((C, 1), lambda i: (0, 0))],
        out_specs=pl.BlockSpec((1, C, T), lambda i: (i, 0, 0)),
        compiler_params=_cparams("parallel"),
    )(x, y, gamma.reshape(C, 1), beta.reshape(C, 1))


@functools.partial(jax.jit, static_argnames=("n_heads",))
def pallas_attention(qkv, mask_t, *, n_heads):
    """Scaled-dot-product attention, grid=(B, n_heads), keys masked in-kernel.

    qkv: [B, 3H, T] (fused q|k|v 1x1-conv output, head-major channel layout),
    mask_t: [B, T, 1] (1 = valid key).  Returns [B, H, T].
    """
    B, C3, T = qkv.shape
    H = C3 // 3
    d = H // n_heads
    scale = 1.0 / math.sqrt(d)
    qkv4 = qkv.reshape(B, 3 * n_heads, d, T)           # free reshape

    def kernel(q_ref, k_ref, v_ref, mt_ref, o_ref):
        q = q_ref[0, 0].astype(jnp.bfloat16)            # [d, T]
        k = k_ref[0, 0].astype(jnp.bfloat16)
        v = v_ref[0, 0].astype(jnp.bfloat16)
        # s[tk, tq] = k[:, tk] . q[:, tq]  (no in-kernel transpose of K)
        s = lax.dot_general(k, q, (((0,), (0,)), ((), ())),
                            preferred_element_type=jnp.float32) * scale
        s = jnp.where(mt_ref[0] > 0, s, -1e4)            # key mask [T, 1]
        s = s - jnp.max(s, axis=0, keepdims=True)
        p = jnp.exp(s)
        p = p * pl.reciprocal(jnp.sum(p, axis=0, keepdims=True), approx=True)
        o = jnp.dot(v, p.astype(jnp.bfloat16), preferred_element_type=jnp.float32)
        o_ref[0, 0] = o.astype(o_ref.dtype)

    # TODO(synk): for long sequences use a key-tiled online-softmax variant.
    out4 = pl.pallas_call(
        kernel,
        out_shape=jax.ShapeDtypeStruct((B, n_heads, d, T), qkv.dtype),
        grid=(B, n_heads),
        in_specs=[pl.BlockSpec((1, 1, d, T), lambda b, h: (b, h, 0, 0)),
                  pl.BlockSpec((1, 1, d, T), lambda b, h: (b, n_heads + h, 0, 0)),
                  pl.BlockSpec((1, 1, d, T), lambda b, h: (b, 2 * n_heads + h, 0, 0)),
                  pl.BlockSpec((1, T, 1), lambda b, h: (b, 0, 0))],
        out_specs=pl.BlockSpec((1, 1, d, T), lambda b, h: (b, h, 0, 0)),
        compiler_params=_cparams("parallel", "parallel"),
    )(qkv4, qkv4, qkv4, mask_t)
    return out4.reshape(B, H, T)


@jax.jit
def pallas_wavenet(x, x_mask, g_all, w_in, b_in, w_rs, b_rs):
    """Whole WaveNet (WN) stack fused into one kernel per batch element.

    All layers' weights stay resident in VMEM; per layer the dilated conv,
    conditioning add, gated tanh*sigmoid, 1x1 res/skip conv, masked residual
    update and skip accumulation are fused (no per-layer HBM round trips).
    x: [B,H,T], x_mask: [B,1,T], g_all: [B, 2H*n_layers, 1],
    w_in: [nl, 2H, K*H] bf16, b_in: [nl, 2H, 1], w_rs: [nl, 2H, H] bf16 (last
    layer zero-padded on the unused residual half), b_rs: [nl, 2H, 1].
    """
    B, H, T = x.shape
    n_layers = w_in.shape[0]
    K = w_in.shape[2] // H
    pad = (K - 1) // 2                        # RVC WaveNet: dilation_rate == 1

    def kernel(x_ref, m_ref, g_ref, win_ref, bin_ref, wrs_ref, brs_ref, o_ref,
               x_sc, col_sc, skip_sc):
        mask = m_ref[0]                                   # [1, T]
        x_sc[...] = x_ref[0]
        skip_sc[...] = jnp.zeros_like(skip_sc)
        # Halo columns are identical for every layer: zero them once.
        for k in range(K):
            off = k - pad
            dst_lo = max(0, -off)
            dst_hi = T - max(0, off)
            rows = slice(k * H, (k + 1) * H)
            if dst_lo > 0:
                col_sc[rows, :dst_lo] = jnp.zeros((H, dst_lo), jnp.bfloat16)
            if dst_hi < T:
                col_sc[rows, dst_hi:] = jnp.zeros((H, T - dst_hi), jnp.bfloat16)
        for i in range(n_layers):
            xb = x_sc[...].astype(jnp.bfloat16)
            for k in range(K):
                off = k - pad
                dst_lo = max(0, -off)
                dst_hi = T - max(0, off)
                rows = slice(k * H, (k + 1) * H)
                col_sc[rows, dst_lo:dst_hi] = xb[:, dst_lo + off:dst_hi + off]
            h = (jnp.dot(win_ref[i], col_sc[...],
                         preferred_element_type=jnp.float32)
                 + bin_ref[i] + g_ref[0, i * 2 * H:(i + 1) * 2 * H])
            acts = jnp.tanh(h[:H]) * jax.nn.sigmoid(h[H:])
            rs = (jnp.dot(wrs_ref[i], acts.astype(jnp.bfloat16),
                          preferred_element_type=jnp.float32) + brs_ref[i])
            if i < n_layers - 1:
                x_sc[...] = (x_sc[...] + rs[:H]) * mask
            skip_sc[...] = skip_sc[...] + rs[H:]
        o_ref[0] = (skip_sc[...] * mask).astype(o_ref.dtype)

    two_h = 2 * H
    return pl.pallas_call(
        kernel,
        out_shape=jax.ShapeDtypeStruct((B, H, T), x.dtype),
        grid=(B,),
        in_specs=[pl.BlockSpec((1, H, T), lambda i: (i, 0, 0)),
                  pl.BlockSpec((1, 1, T), lambda i: (i, 0, 0)),
                  pl.BlockSpec((1, two_h * n_layers, 1), lambda i: (i, 0, 0)),
                  pl.BlockSpec((n_layers, two_h, K * H), lambda i: (0, 0, 0)),
                  pl.BlockSpec((n_layers, two_h, 1), lambda i: (0, 0, 0)),
                  pl.BlockSpec((n_layers, two_h, H), lambda i: (0, 0, 0)),
                  pl.BlockSpec((n_layers, two_h, 1), lambda i: (0, 0, 0))],
        out_specs=pl.BlockSpec((1, H, T), lambda i: (i, 0, 0)),
        scratch_shapes=[pltpu.VMEM((H, T), jnp.float32),
                        pltpu.VMEM((K * H, T), jnp.bfloat16),
                        pltpu.VMEM((H, T), jnp.float32)],
        compiler_params=_cparams("parallel"),
    )(x, x_mask, g_all, w_in, b_in, w_rs, b_rs)


# ----------------------------------------------------------------------------
# Plain-JAX glue helpers
# ----------------------------------------------------------------------------

def sequence_mask(lengths, max_len):
    return (jnp.arange(max_len)[None, :] < lengths[:, None]).astype(jnp.float32)


def slice_segments(x, ids_str, segment_size):
    return jnp.stack([jax.lax.dynamic_slice_in_dim(x[i], ids_str[i],
                                                   segment_size, axis=-1)
                      for i in range(x.shape[0])])


def rand_slice_segments(x, x_lengths, segment_size, key):
    b = x.shape[0]
    ids_str_max = jnp.maximum(x_lengths - segment_size + 1, 0).astype(jnp.float32)
    ids_str = (jax.random.uniform(key, (b,)) * ids_str_max).astype(jnp.int32)
    return slice_segments(x, ids_str, segment_size), ids_str


def _convtrans_geometry(k, stride, padding):
    """Polyphase decomposition of torch ConvTranspose1d (k, stride, padding)."""
    phases = []
    for r in range(stride):
        j0 = (r + padding) % stride
        taps = [(j, (r + padding - j) // stride) for j in range(j0, k, stride)]
        phases.append(taps)
    m_min = min(m for ph in phases for _, m in ph)
    m_max = max(m for ph in phases for _, m in ph)
    # TODO(synk): other geometries would need the zero-stuffed fallback; every
    # HiFi-GAN geometry (k = 2u, p = u/2) satisfies m_min <= 0 <= m_max.
    assert m_min <= 0 <= m_max, "unsupported ConvTranspose1d geometry"
    return phases, m_min, m_max


# ----------------------------------------------------------------------------
# Sub-module forwards (structure mirrors the RVC/VITS PyTorch modules)
# ----------------------------------------------------------------------------

def ffn_fwd(p, x, x_mask, k):
    pad_l, pad_r = (k - 1) // 2, k // 2
    y = fused_conv1d(x, p["c1"]["w2"], p["c1"]["b2"], pad_left=pad_l, pad_right=pad_r,
                     in_mask=x_mask, post_act="relu")
    y = fused_conv1d(y, p["c2"]["w2"], p["c2"]["b2"], pad_left=pad_l, pad_right=pad_r,
                     in_mask=x_mask, out_mask=x_mask)
    return y


def mha_fwd(p, x, mask_t, n_heads):
    qkv = fused_conv1d(x, p["qkv_w2"], p["qkv_b2"])          # one fused q|k|v conv
    out = pallas_attention(qkv, mask_t, n_heads=n_heads)
    return fused_conv1d(out, p["o_w2"], p["o_b2"])


def attention_encoder_fwd(p, x, x_mask, cfg):
    x = x * x_mask
    mask_t = jnp.transpose(x_mask, (0, 2, 1))                # [B, T, 1], built once
    for layer in p["layers"]:
        y = mha_fwd(layer["attn"], x, mask_t, cfg["n_heads"])
        x = pallas_add_layernorm(x, y, layer["norm1_g"], layer["norm1_b"])
        y = ffn_fwd(layer["ffn"], x, x_mask, cfg["kernel_size"])
        x = pallas_add_layernorm(x, y, layer["norm2_g"], layer["norm2_b"])
    return x * x_mask


def text_encoder_fwd(p, phone, lengths, cfg):
    B, T, D = phone.shape
    H = cfg["hidden_channels"]
    t_pad = _round_up(T, LANE)
    x = pallas_linear(phone.reshape(B * T, D), p["emb_phone_w"], p["emb_phone_b"],
                      scale=math.sqrt(H), lrelu_slope=0.1).reshape(B, T, H)
    # use_f0=False -> no pitch embedding.
    x = _pad_time(jnp.transpose(x, (0, 2, 1)), t_pad)        # [B, H, t_pad]
    x_mask = sequence_mask(lengths, t_pad)[:, None, :]        # [B, 1, t_pad]
    x = attention_encoder_fwd(p["encoder"], x, x_mask, cfg)
    stats = fused_conv1d(x, p["proj"]["w2"], p["proj"]["b2"], out_mask=x_mask)
    m, logs = jnp.split(stats, 2, axis=1)
    return m[:, :, :T], logs[:, :, :T], x_mask[:, :, :T]


def posterior_encoder_fwd(p, y, y_lengths, g, cfg, key):
    B, _, T = y.shape
    t_pad = _round_up(T, LANE)
    y = _pad_time(y, t_pad)
    y_mask = sequence_mask(y_lengths, t_pad)[:, None, :]
    x = fused_conv1d(y, p["pre"]["w2"], p["pre"]["b2"], out_mask=y_mask)
    g_all = pallas_linear(g[:, :, 0], p["wn"]["cond_w"], p["wn"]["cond_b"])[:, :, None]
    x = pallas_wavenet(x, y_mask, g_all, p["wn"]["w_in"], p["wn"]["b_in"],
                       p["wn"]["w_rs"], p["wn"]["b_rs"])
    stats = fused_conv1d(x, p["proj"]["w2"], p["proj"]["b2"], out_mask=y_mask)
    m, logs = jnp.split(stats, 2, axis=1)
    z = (m + jax.random.normal(key, m.shape, m.dtype) * jnp.exp(logs)) * y_mask
    return z, m, logs, y_mask


def coupling_fwd(fl, x, x_mask, g, cfg):
    half = cfg["inter_channels"] // 2
    x0, x1 = x[:, :half], x[:, half:]
    h = fused_conv1d(x0, fl["pre"]["w2"], fl["pre"]["b2"], out_mask=x_mask)
    g_all = pallas_linear(g[:, :, 0], fl["wn"]["cond_w"], fl["wn"]["cond_b"])[:, :, None]
    h = pallas_wavenet(h, x_mask, g_all, fl["wn"]["w_in"], fl["wn"]["b_in"],
                       fl["wn"]["w_rs"], fl["wn"]["b_rs"])
    m = fused_conv1d(h, fl["post"]["w2"], fl["post"]["b2"], out_mask=x_mask)  # mean_only
    x1 = m + x1 * x_mask
    return jnp.concatenate([x0, x1], axis=1)


def flow_fwd(p, x, x_mask, g, cfg):
    for fl in p["flows"]:
        x = coupling_fwd(fl, x, x_mask, g, cfg)
        x = jnp.flip(x, axis=1)                               # Flip module
    return x


def resblock_fwd(rp, x, mask, k, dilations, final_scale):
    n = len(dilations)
    for idx, (c1, c2, d) in enumerate(zip(rp["convs1"], rp["convs2"], dilations)):
        p1 = (k * d - d) // 2
        xt = fused_conv1d(x, c1["w2"], c1["b2"], dilation=d, pad_left=p1, pad_right=p1,
                          pre_slope=0.1, out_mask=mask)
        scale = final_scale if (idx == n - 1 and final_scale != 1.0) else None
        p2 = (k - 1) // 2
        x = fused_conv1d(xt, c2["w2"], c2["b2"], pad_left=p2, pad_right=p2,
                         pre_slope=0.1, residual=x, out_scale=scale, out_mask=mask)
    return x


def hifigan_fwd(p, x, g, cfg):
    B, _, seg = x.shape
    upc = cfg["upsample_initial_channel"]
    t_pad = _round_up(seg, LANE)
    x = _pad_time(x, t_pad)

    def stage_mask(t_total, valid):
        m = (jnp.arange(t_total) < valid).astype(jnp.float32)
        return jnp.broadcast_to(m[None, None, :], (B, 1, t_total))

    cond_g = pallas_linear(g[:, :, 0], p["cond_w"], p["cond_b"])[:, :, None]
    mask = stage_mask(t_pad, seg)
    x = fused_conv1d(x, p["pre"]["w2"], p["pre"]["b2"], pad_left=3, pad_right=3,
                     add_bcast=cond_g, out_mask=mask)
    num_kernels = len(cfg["resblock_kernel_sizes"])
    cur_len = seg
    for i, (u, ks) in enumerate(zip(cfg["upsample_rates"], cfg["upsample_kernel_sizes"])):
        padding = (ks - u) // 2
        _, m_min, m_max = _convtrans_geometry(ks, u, padding)
        c_out = upc // (2 ** (i + 1))
        # All `u` polyphase phases in one pallas_call (pre-LeakyReLU fused).
        y4 = fused_conv1d(x, p["ups"][i]["w2"], p["ups"][i]["b2"],
                          pad_left=-m_min, pad_right=m_max,
                          pre_slope=0.1, out_mask=mask, phase_groups=u)
        y = jnp.transpose(y4, (0, 2, 3, 1)).reshape(B, c_out, t_pad * u)
        cur_len = cur_len * u
        t_pad = _round_up(cur_len, LANE)
        x = y[:, :, :t_pad]
        mask = stage_mask(t_pad, cur_len)
        xs = None
        for j in range(num_kernels):
            r = resblock_fwd(p["resblocks"][i * num_kernels + j], x, mask,
                             cfg["resblock_kernel_sizes"][j],
                             cfg["resblock_dilation_sizes"][j],
                             1.0 / num_kernels)
            xs = r if xs is None else xs + r
        x = xs
    # final LeakyReLU(0.01) + conv_post + tanh fused into one kernel
    x = fused_conv1d(x, p["post"]["w2"], p["post"]["b2"], pad_left=3, pad_right=3,
                     pre_slope=0.01, post_act="tanh")
    return x[:, :, :cur_len]


# ----------------------------------------------------------------------------
# Synthesizer top-level forward (training path: y is provided, randomized=True)
# ----------------------------------------------------------------------------

def synthesizer_forward(params, phone, phone_lengths, y, y_lengths, ds, cfg, rng):
    g = params["emb_g"][ds][:, :, None]                       # [B, gin, 1]
    m_p, logs_p, x_mask = text_encoder_fwd(params["enc_p"], phone, phone_lengths, cfg)
    k1, k2 = jax.random.split(rng)
    T_y = y.shape[-1]
    z_pad, m_q_pad, logs_q_pad, y_mask_pad = posterior_encoder_fwd(
        params["enc_q"], y, y_lengths, g, cfg, k1)
    z_p_pad = flow_fwd(params["flow"], z_pad, y_mask_pad, g, cfg)
    z = z_pad[:, :, :T_y]
    z_p = z_p_pad[:, :, :T_y]
    m_q = m_q_pad[:, :, :T_y]
    logs_q = logs_q_pad[:, :, :T_y]
    y_mask = y_mask_pad[:, :, :T_y]
    z_slice, ids_slice = rand_slice_segments(z, y_lengths, cfg["segment_size"], k2)
    o = hifigan_fwd(params["dec"], z_slice, g, cfg)
    return o, ids_slice, x_mask, y_mask, (z, z_p, m_p, logs_p, m_q, logs_q)


# ----------------------------------------------------------------------------
# Deterministic synthetic parameter init (weights pre-laid-out for the kernels)
# ----------------------------------------------------------------------------

class KeyGen:
    def __init__(self, seed=0):
        self._key = jax.random.PRNGKey(seed)

    def __call__(self):
        self._key, sub = jax.random.split(self._key)
        return sub


def _conv_p(kg, c_in, c_out, k, bias=True):
    scale = 1.0 / math.sqrt(c_in * k)
    w = scale * jax.random.normal(kg(), (c_out, c_in, k), jnp.float32)
    b = (scale * jax.random.normal(kg(), (c_out,), jnp.float32)
         if bias else jnp.zeros((c_out,), jnp.float32))
    w2 = jnp.transpose(w, (0, 2, 1)).reshape(c_out, k * c_in).astype(jnp.bfloat16)
    return {"w2": w2, "b2": b.reshape(c_out, 1)}


def _linear_p(kg, d_in, d_out):
    scale = 1.0 / math.sqrt(d_in)
    w = (scale * jax.random.normal(kg(), (d_in, d_out), jnp.float32)).astype(jnp.bfloat16)
    b = scale * jax.random.normal(kg(), (d_out,), jnp.float32)
    return w, b


def _wavenet_p(kg, hidden, kernel_size, n_layers, gin):
    H, K = hidden, kernel_size
    s_in, s_rs = 1.0 / math.sqrt(H * K), 1.0 / math.sqrt(H)
    w_in, b_in, w_rs, b_rs = [], [], [], []
    for i in range(n_layers):
        wi = s_in * jax.random.normal(kg(), (2 * H, H, K), jnp.float32)
        bi = s_in * jax.random.normal(kg(), (2 * H,), jnp.float32)
        w_in.append(jnp.transpose(wi, (0, 2, 1)).reshape(2 * H, K * H))
        b_in.append(bi.reshape(2 * H, 1))
        rs_ch = 2 * H if i < n_layers - 1 else H
        wr = s_rs * jax.random.normal(kg(), (rs_ch, H), jnp.float32)
        br = s_rs * jax.random.normal(kg(), (rs_ch,), jnp.float32)
        if rs_ch == H:       # last layer: zero-pad the (unused) residual half
            wr = jnp.concatenate([jnp.zeros((H, H), jnp.float32), wr], axis=0)
            br = jnp.concatenate([jnp.zeros((H,), jnp.float32), br], axis=0)
        w_rs.append(wr)
        b_rs.append(br.reshape(2 * H, 1))
    cond_w, cond_b = _linear_p(kg, gin, 2 * H * n_layers)
    return {"w_in": jnp.stack(w_in).astype(jnp.bfloat16),
            "b_in": jnp.stack(b_in),
            "w_rs": jnp.stack(w_rs).astype(jnp.bfloat16),
            "b_rs": jnp.stack(b_rs),
            "cond_w": cond_w, "cond_b": cond_b}


def _convtrans_p(kg, c_in, c_out, k, stride, padding):
    """Stacked polyphase weight [stride*C_out, Ku*C_in] for the fused kernel."""
    phases, m_min, m_max = _convtrans_geometry(k, stride, padding)
    ku = m_max - m_min + 1
    scale = 1.0 / math.sqrt(c_in * k)
    w = np.asarray(scale * jax.random.normal(kg(), (c_in, c_out, k), jnp.float32))
    wst = np.zeros((stride * c_out, ku * c_in), np.float32)
    for r, taps in enumerate(phases):
        for j, m in taps:
            kk = m - m_min
            wst[r * c_out:(r + 1) * c_out, kk * c_in:(kk + 1) * c_in] = w[:, :, j].T
    bst = np.zeros((stride * c_out, 1), np.float32)
    return {"w2": jnp.asarray(wst, jnp.bfloat16), "b2": jnp.asarray(bst)}


def init_params(cfg, seed=0):
    kg = KeyGen(seed)
    H, I, Fc, G = (cfg["hidden_channels"], cfg["inter_channels"],
                   cfg["filter_channels"], cfg["gin_channels"])
    D = cfg["text_enc_hidden_dim"]
    p = {"emb_g": 0.1 * jax.random.normal(kg(), (cfg["spk_embed_dim"], G), jnp.float32)}

    emb_w, _ = _linear_p(kg, D, H)
    enc_p = {"emb_phone_w": emb_w,
             "emb_phone_b": jnp.zeros((H,), jnp.float32),
             "encoder": {"layers": []},
             "proj": _conv_p(kg, H, 2 * I, 1)}
    for _ in range(cfg["n_layers"]):
        q = _conv_p(kg, H, H, 1)
        k_ = _conv_p(kg, H, H, 1)
        v = _conv_p(kg, H, H, 1)
        o = _conv_p(kg, H, H, 1)
        enc_p["encoder"]["layers"].append({
            "attn": {"qkv_w2": jnp.concatenate([q["w2"], k_["w2"], v["w2"]], axis=0),
                     "qkv_b2": jnp.concatenate([q["b2"], k_["b2"], v["b2"]], axis=0),
                     "o_w2": o["w2"], "o_b2": o["b2"]},
            "norm1_g": jnp.ones((H,), jnp.float32),
            "norm1_b": jnp.zeros((H,), jnp.float32),
            "ffn": {"c1": _conv_p(kg, H, Fc, cfg["kernel_size"]),
                    "c2": _conv_p(kg, Fc, H, cfg["kernel_size"])},
            "norm2_g": jnp.ones((H,), jnp.float32),
            "norm2_b": jnp.zeros((H,), jnp.float32)})
    p["enc_p"] = enc_p

    p["enc_q"] = {"pre": _conv_p(kg, cfg["spec_channels"], H, 1),
                  "wn": _wavenet_p(kg, H, 5, 16, G),
                  "proj": _conv_p(kg, H, 2 * I, 1)}

    half = I // 2
    p["flow"] = {"flows": [{"pre": _conv_p(kg, half, H, 1),
                            "wn": _wavenet_p(kg, H, 5, 3, G),
                            "post": _conv_p(kg, H, half, 1)} for _ in range(4)]}

    upc = cfg["upsample_initial_channel"]
    cond_w, cond_b = _linear_p(kg, G, upc)
    dec = {"pre": _conv_p(kg, I, upc, 7), "cond_w": cond_w, "cond_b": cond_b,
           "ups": [], "resblocks": []}
    ch = upc
    for i, (u, ks) in enumerate(zip(cfg["upsample_rates"], cfg["upsample_kernel_sizes"])):
        c_out = upc // (2 ** (i + 1))
        dec["ups"].append(_convtrans_p(kg, ch, c_out, ks, u, (ks - u) // 2))
        ch = c_out
        for k_rb, d_rb in zip(cfg["resblock_kernel_sizes"], cfg["resblock_dilation_sizes"]):
            dec["resblocks"].append({
                "convs1": [_conv_p(kg, ch, ch, k_rb) for _ in d_rb],
                "convs2": [_conv_p(kg, ch, ch, k_rb) for _ in d_rb]})
    dec["post"] = _conv_p(kg, ch, 1, 7, bias=False)
    p["dec"] = dec
    return p


# ----------------------------------------------------------------------------
# Main
# ----------------------------------------------------------------------------

if __name__ == "__main__":
    cfg = dict(
        spec_channels=16, segment_size=4, inter_channels=8, hidden_channels=8,
        filter_channels=16, n_heads=2, n_layers=2, kernel_size=3, p_dropout=0.0,
        resblock="1", resblock_kernel_sizes=[3], resblock_dilation_sizes=[[1, 3]],
        upsample_rates=[2, 2], upsample_initial_channel=16, upsample_kernel_sizes=[4, 4],
        spk_embed_dim=4, gin_channels=8, sr=16000, use_f0=False, text_enc_hidden_dim=32,
    )
    params = init_params(cfg, seed=0)

    key = jax.random.PRNGKey(0)
    k_phone, k_y, k_fwd = jax.random.split(key, 3)

    B, T_p, T_y = 2, 8, 16
    phone = jax.random.normal(k_phone, (B, T_p, cfg["text_enc_hidden_dim"]), jnp.float32)
    phone_lengths = jnp.array([8, 6], jnp.int32)
    y = jax.random.normal(k_y, (B, cfg["spec_channels"], T_y), jnp.float32)
    y_lengths = jnp.array([16, 12], jnp.int32)
    ds = jnp.array([1, 3], jnp.int32)

    @jax.jit
    def forward(params, phone, phone_lengths, y, y_lengths, ds, rng):
        return synthesizer_forward(params, phone, phone_lengths, y, y_lengths,
                                   ds, cfg, rng)

    out = forward(params, phone, phone_lengths, y, y_lengths, ds, k_fwd)
    jax.block_until_ready(out)
    o, ids_slice, x_mask, y_mask, (z, z_p, m_p, logs_p, m_q, logs_q) = out

    total_up = math.prod(cfg["upsample_rates"])
    assert o.shape == (B, 1, cfg["segment_size"] * total_up)
    assert x_mask.shape == (B, 1, T_p) and y_mask.shape == (B, 1, T_y)
    assert z.shape == (B, cfg["inter_channels"], T_y) and z_p.shape == z.shape
    assert m_p.shape == (B, cfg["inter_channels"], T_p)
    print("KERNEL_OK")
</pallas_src>

<mosaic_0001>
module attributes {stable_mosaic.version = 11 : i64} {
  func.func @kernel(%arg0: i32, %arg1: memref<16x32xf32, #tpu.memory_space<vmem>>, %arg2: memref<32x8xbf16, #tpu.memory_space<vmem>>, %arg3: memref<1x8xf32, #tpu.memory_space<vmem>>, %arg4: memref<16x8xf32, #tpu.memory_space<vmem>>) attributes {dimension_semantics = [#tpu.dimension_semantics<arbitrary>], iteration_bounds = array<i64: 1>, scalar_prefetch = 0 : i64, scratch_operands = 0 : i64, tpu.core_type = #tpu.core_type<tc>, window_params = [{pipeline_mode = #tpu.pipeline_mode<synchronous>, transform_indices = @transform_0, window_bounds = array<i64: 16, 32>}, {pipeline_mode = #tpu.pipeline_mode<synchronous>, transform_indices = @transform_1, window_bounds = array<i64: 32, 8>}, {pipeline_mode = #tpu.pipeline_mode<synchronous>, transform_indices = @transform_2, window_bounds = array<i64: 1, 8>}, {pipeline_mode = #tpu.pipeline_mode<synchronous>, transform_indices = @transform_3, window_bounds = array<i64: 16, 8>}]} {
    %c0 = arith.constant 0 : index
    %c0_0 = arith.constant 0 : index
    %0 = vector.load %arg1[%c0, %c0_0] : memref<16x32xf32, #tpu.memory_space<vmem>>, vector<16x32xf32>
    %1 = arith.truncf %0 : vector<16x32xf32> to vector<16x32xbf16>
    %c0_1 = arith.constant 0 : index
    %c0_2 = arith.constant 0 : index
    %2 = vector.load %arg2[%c0_1, %c0_2] : memref<32x8xbf16, #tpu.memory_space<vmem>>, vector<32x8xbf16>
    %cst = arith.constant dense<0.000000e+00> : vector<16x8xf32>
    %3 = tpu.matmul %1, %2, %cst {dimension_numbers = #tpu.dot_dimension_numbers<[1], [0], [0], [1], [0, 0, 1, 1], [], []>} : vector<16x32xbf16>, vector<32x8xbf16>, vector<16x8xf32> -> vector<16x8xf32>
    %c0_3 = arith.constant 0 : index
    %c0_4 = arith.constant 0 : index
    %4 = vector.load %arg3[%c0_3, %c0_4] : memref<1x8xf32, #tpu.memory_space<vmem>>, vector<1x8xf32>
    %5 = vector.broadcast %4 : vector<1x8xf32> to vector<16x8xf32>
    %6 = arith.addf %3, %5 : vector<16x8xf32>
    %cst_5 = arith.constant 2.82842708 : f32
    %7 = vector.broadcast %cst_5 : f32 to vector<16x8xf32>
    %8 = arith.mulf %6, %7 : vector<16x8xf32>
    %cst_6 = arith.constant 0.000000e+00 : f32
    %9 = vector.broadcast %cst_6 : f32 to vector<16x8xf32>
    %10 = arith.cmpf oge, %8, %9 : vector<16x8xf32>
    %cst_7 = arith.constant 1.000000e-01 : f32
    %11 = vector.broadcast %cst_7 : f32 to vector<16x8xf32>
    %12 = arith.mulf %11, %8 : vector<16x8xf32>
    %13 = arith.select %10, %8, %12 : vector<16x8xi1>, vector<16x8xf32>
    %c0_8 = arith.constant 0 : index
    %c0_9 = arith.constant 0 : index
    %14 = vector.load %arg4[%c0_8, %c0_9] : memref<16x8xf32, #tpu.memory_space<vmem>>, vector<16x8xf32>
    tpu.vector_store %arg4[%c0_8, %c0_9], %13 {strides = array<i32>} : memref<16x8xf32, #tpu.memory_space<vmem>>, vector<16x8xf32>,
    return
  }
  func.func @transform_0(%arg0: i32) -> (i32, i32) {
    %c0_i32 = arith.constant 0 : i32
    %c0_i32_0 = arith.constant 0 : i32
    %c0_i32_1 = arith.constant 0 : i32
    return %c0_i32, %c0_i32_0 : i32, i32
  }
  func.func @transform_1(%arg0: i32) -> (i32, i32) {
    %c0_i32 = arith.constant 0 : i32
    %c0_i32_0 = arith.constant 0 : i32
    %c0_i32_1 = arith.constant 0 : i32
    return %c0_i32, %c0_i32_0 : i32, i32
  }
  func.func @transform_2(%arg0: i32) -> (i32, i32) {
    %c0_i32 = arith.constant 0 : i32
    %c0_i32_0 = arith.constant 0 : i32
    %c0_i32_1 = arith.constant 0 : i32
    return %c0_i32, %c0_i32_0 : i32, i32
  }
  func.func @transform_3(%arg0: i32) -> (i32, i32) {
    %c0_i32 = arith.constant 0 : i32
    %c0_i32_0 = arith.constant 0 : i32
    %c0_i32_1 = arith.constant 0 : i32
    return %c0_i32, %c0_i32_0 : i32, i32
  }
}

</mosaic_0001>

<llo_original>
// kernel: pallas_linear.1
$region0: #{pallas_linear.1}
  #allocation0 [shape = 'u32[]', space=smem, size = 0x4, offset = 0x4, fixed_abs, tag = 'smem constant byte address 0x4 - core index']
  #allocation1 [shape = 'u32[72,128]{1,0:T(1,128)}', space=vmem, size = 0x9000, scoped, tag = 'internal scratch']
  %s0 = inlined_call_operand.vmem [shape: f32[16,32], index: 0, kind: input, shape index: {}]
  %s1 = inlined_call_operand.vmem [shape: bf16[32,8], index: 1, kind: input, shape index: {}]
  %s2 = inlined_call_operand.vmem [shape: f32[1,8], index: 2, kind: input, shape index: {}]
  %s3 = inlined_call_operand.vmem [shape: f32[16,8], index: 3, kind: output, shape index: {}]
  %s4 = sld [smem:[#allocation0]]
  $region22: #{pallas_linear.1} parent=0
    _
  %s6 = ssub.s32 1, %s4
  %s7 = scalar_select 0, %s6, %s4
  // Predicated region
  $region2: #{pallas_linear.1} parent=0 // pred_check
    _
  $region3: #{pallas_linear.1} parent=0 // pred_check_branch
    %9 = sbr.rel (0) target = $region5
  $region4: #{pallas_linear.1} parent=0 // pred_region
    _
  $region5: #{pallas_linear.1} parent=0 // pred_fallthru
    _
  // Predicated region
  $region6: #{pallas_linear.1} parent=0 // pred_check
    _
  $region7: #{pallas_linear.1} parent=0 // pred_check_branch
    %11 = sbr.rel (0) target = $region9
  $region8: #{pallas_linear.1} parent=0 // pred_region
    _
  $region9: #{pallas_linear.1} parent=0 // pred_fallthru
    _
  // Predicated region
  $region10: #{pallas_linear.1} parent=0 // pred_check
    _
  $region11: #{pallas_linear.1} parent=0 // pred_check_branch
    %13 = sbr.rel (0) target = $region13
  $region12: #{pallas_linear.1} parent=0 // pred_region
    _
  $region13: #{pallas_linear.1} parent=0 // pred_fallthru
    _
  %v15 = vld [vmem:[%s0] sm:$0xff]
  %v16 = vld [vmem:[%s0 + $0x8] sm:$0xff]
  %v17 = vpack.c.bf16 %v16, %v15
  %v18 = vld [vmem:[%s1] sm:$0xf]
  %v19 = vld [vmem:[%s1 + $0x4] sm:$0xf]
  %v20 = vld [vmem:[%s1 + $0x8] sm:$0xf]
  %v21 = vld [vmem:[%s1 + $0xc] sm:$0xf]
  %v22 = vld [vmem:[%s2] sm:$0x1]
  %v24 = vperm.slane %v22, 0
  %v30 = vunpack.c.l.b16 %v18
  %v31 = vunpack.c.l.b16 %v19
  %v32 = vunpack.c.l.b16 %v20
  %v33 = vunpack.c.l.b16 %v21
  %v34 = vpack.c.b16 %v31, %v30
  %v35 = vpack.c.b16 %v33, %v32
  %vm38 = vcmask 261120
  %v40 = vsel %vm38, %v17, 0
  %42 = vmatpush.bf16.msra.mxu0 0
  %43 = vmatpush.bf16.msra.mxu0 0
  %44 = vmatpush.bf16.msra.mxu0 0
  %45 = vmatpush.bf16.msra.mxu0 0
  %46 = vmatpush.bf16.msra.mxu0 0
  %47 = vmatpush.bf16.msra.mxu0 0
  %48 = vmatpush.bf16.msra.mxu0 %v35
  %49 = vmatpush.bf16.msra.mxu0 %v34
  %50 = vmatmul.bf16.gmra.mxu0 %v40
  %v51 = vpop.f32.mrf.mxu0
  %v52 = vadd.f32 %v24, %v51
  %v53 = vpop.f32.mrf.mxu0
  %v54 = vadd.f32 %v24, %v53
  %55 = vdwg.mxu0
  %v56 = vmul.f32 %v52, 2.828427
  %v57 = vmul.f32 %v54, 2.828427
  %vm58 = vcmp.ge.f32.partialorder %v56, 0.0
  %vm59 = vcmp.ge.f32.partialorder %v57, 0.0
  %v60 = vmul.f32 %v56, 0.1
  %v61 = vmul.f32 %v57, 0.1
  %v62 = vsel %vm58, %v56, %v60
  %v63 = vsel %vm59, %v57, %v61
  %vm64 = vcmask 64512
  %65 = vst.msk [vmem:[%s3] sm:$0xff] %vm64, %v62
  %66 = vst.msk [vmem:[%s3 + $0x8] sm:$0xff] %vm64, %v63
  // Predicated region
  $region14: #{pallas_linear.1} parent=0 // pred_check
    _
  $region15: #{pallas_linear.1} parent=0 // pred_check_branch
    %68 = sbr.rel (0) target = $region17
  $region16: #{pallas_linear.1} parent=0 // pred_region
    _
  $region17: #{pallas_linear.1} parent=0 // pred_fallthru
    _
  // Predicated region
  $region18: #{pallas_linear.1} parent=0 // pred_check
    _
  $region19: #{pallas_linear.1} parent=0 // pred_check_branch
    %70 = sbr.rel (0) target = $region21
  $region20: #{pallas_linear.1} parent=0 // pred_region
    _
  $region21: #{pallas_linear.1} parent=0 // pred_fallthru
    _

</llo_original>
